<compile_context>
chip_gen: v7x
topology: tpu7x:2x2x1
jax: 0.10.0
libtpu: 0.0.40
codegen_flags: <defaults>
</compile_context>

<pallas_src>
import functools

import jax
import jax.numpy as jnp
from jax.experimental import pallas as pl
from jax.experimental.pallas import tpu as pltpu


def _vdl_g_kernel(
    fv_ref,       # (1, N0+N1) f32  fake validities of the two voxel heads, concatenated
    ame_ref,      # (3, E)     f32  rows: att / mask / area-per-edge (host-gathered)
    scatter_ref,  # (E, 2Ct+B) f32  fused [edge->class | edge->batch->class | edge->batch]
    tgt_ref,      # (3, L)     f32  rows: program_target_ratio / FAR target / site area
    out_ref,      # (1, 4)     f32  [total, adversarial, target_ratio, far] losses
    *, n0, n1, ct, nb, tr_weight, far_weight,
):
    f32 = jnp.float32

    # ---- adversarial loss: gan_loss == 'WGANGP' (== 'hinge' generator branch) ----
    fv = fv_ref[...]                                                     # (1, N0+N1)
    lane = jax.lax.broadcasted_iota(jnp.int32, fv.shape, 1)
    sum0 = jnp.sum(jnp.where(lane < n0, fv, 0.0), axis=1, keepdims=True)   # (1, 1)
    sum1 = jnp.sum(jnp.where(lane >= n0, fv, 0.0), axis=1, keepdims=True)  # (1, 1)
    adv = -(sum0 * (1.0 / n0)) - (sum1 * (1.0 / n1))                       # (1, 1)

    # ---- get_program_ratio: weighted edge areas + ONE fused scatter matmul ------
    att = ame_ref[0:1, :]
    mask = ame_ref[1:2, :]
    area_e = ame_ref[2:3, :]
    weighted = att * area_e * mask                                       # (1, E)

    agg = jnp.dot(weighted, scatter_ref[...],
                  preferred_element_type=f32,
                  precision=jax.lax.Precision.HIGHEST)                   # (1, 2Ct+B)
    class_w = agg[:, 0:ct]                                               # (1, Ct)
    batch_total_c = agg[:, ct:2 * ct]                                    # (1, Ct)
    batch_total = agg[:, 2 * ct:2 * ct + nb]                             # (1, B)

    tgt_ratio = tgt_ref[0:1, :][:, 0:ct]                                 # (1, Ct)
    far_tgt = tgt_ref[1:2, :][:, 0:nb]                                   # (1, B)
    site_area = tgt_ref[2:3, :][:, 0:nb]                                 # (1, B)

    norm_class_w = class_w / batch_total_c                               # exact divide
    far = batch_total / site_area                                        # exact divide

    def smooth_l1_mean(pred, target):  # torch smooth_l1_loss: beta=1.0, reduction='mean'
        d = pred - target
        ad = jnp.abs(d)
        per = jnp.where(ad < 1.0, 0.5 * d * d, ad - 0.5)
        return jnp.sum(per, axis=1, keepdims=True) * (1.0 / per.shape[1])

    tr_loss = tr_weight * smooth_l1_mean(norm_class_w, tgt_ratio)        # (1, 1)
    far_loss = far_weight * smooth_l1_mean(far, far_tgt)                 # (1, 1)
    total = adv + tr_loss + far_loss                                     # (1, 1)

    # pack the four scalars into a single lane row (one vector store)
    lane4 = jax.lax.broadcasted_iota(jnp.int32, (1, 4), 1)
    out_ref[...] = (jnp.where(lane4 == 0, total, 0.0)
                    + jnp.where(lane4 == 1, adv, 0.0)
                    + jnp.where(lane4 == 2, tr_loss, 0.0)
                    + jnp.where(lane4 == 3, far_loss, 0.0))


def volumetric_design_loss_g(fake_validity_voxel, att, mask, vox_feat,
                             edge_voxel, edge_cluster, cluster_batch,
                             program_target_ratio, far_target, site_area,
                             *, area_index_in_voxel_feature, tr_weight, far_weight):
    """Host-side layout plumbing + static-graph pre-composition, then one kernel."""
    f32 = jnp.float32
    fv0, fv1 = fake_validity_voxel
    n0, n1 = int(fv0.shape[0]), int(fv1.shape[0])
    nb = int(site_area.shape[0])
    ct = int(program_target_ratio.shape[0])

    # input 1: both fake-validity heads in one lane row (lengths are static)
    fv_row = jnp.concatenate([jnp.asarray(fv0, f32).reshape(-1),
                              jnp.asarray(fv1, f32).reshape(-1)]).reshape(1, -1)

    # input 2: att / mask / host-gathered area column, one (3, E) slab
    area_e = jnp.asarray(vox_feat, f32)[edge_voxel, area_index_in_voxel_feature]
    ame = jnp.stack([jnp.asarray(att, f32).reshape(-1),
                     jnp.asarray(mask, f32).reshape(-1),
                     area_e.reshape(-1)], axis=0)                        # (3, E)

    # input 3: static graph scatter chain pre-composed into ONE lane-shared matrix
    # (f32: 0/1 entries are exact, avoids any in-kernel cast; bf16 only pays off
    #  at production E where HBM traffic for this matrix dominates -> see TODO)
    ec_oh = jax.nn.one_hot(edge_cluster, ct, dtype=f32)                  # (E, Ct) edge->class
    eb_oh = jax.nn.one_hot(cluster_batch[edge_cluster], nb, dtype=f32)   # (E, B)  edge->batch
    bc_oh = jax.nn.one_hot(cluster_batch, nb, dtype=f32).T               # (B, Ct) batch->class
    ebc = eb_oh @ bc_oh                                                  # (E, Ct) edge->batch->class
    scatter = jnp.concatenate([ec_oh, ebc, eb_oh], axis=1)               # (E, 2Ct+B)

    # input 4: the three small target rows, stacked and lane-padded to a common L
    lmax = max(ct, nb)

    def pad_row(x, n):
        x = jnp.asarray(x, f32).reshape(-1)
        return jnp.pad(x, (0, lmax - n))

    targets = jnp.stack([pad_row(program_target_ratio, ct),
                         pad_row(far_target, nb),
                         pad_row(site_area, nb)], axis=0)                # (3, L)

    kernel = functools.partial(_vdl_g_kernel, n0=n0, n1=n1, ct=ct, nb=nb,
                               tr_weight=float(tr_weight),
                               far_weight=float(far_weight))
    vmem = pl.BlockSpec(memory_space=pltpu.MemorySpace.VMEM)
    out = pl.pallas_call(
        kernel,
        out_shape=jax.ShapeDtypeStruct((1, 4), f32),
        in_specs=[vmem, vmem, vmem, vmem],
        out_specs=vmem,
    )(fv_row, ame, scatter, targets)
    return out[0, 0], out[0, 1], out[0, 2], out[0, 3]


def _reference(fake_validity_voxel, att, mask, vox_feat, edge_voxel, edge_cluster,
               cluster_batch, program_target_ratio, far_target, site_area,
               *, area_index_in_voxel_feature, tr_weight, far_weight):
    """Pure-JAX mirror of the torch forward (WGANGP branch + get_program_ratio)."""
    fv0, fv1 = fake_validity_voxel
    B = site_area.shape[0]
    Ct = program_target_ratio.shape[0]

    adv = -jnp.mean(fv0) - jnp.mean(fv1)

    area_e = vox_feat[edge_voxel, area_index_in_voxel_feature]
    weighted = att * area_e * mask
    class_w = jax.ops.segment_sum(weighted, edge_cluster, num_segments=Ct)
    batch_total = jax.ops.segment_sum(class_w, cluster_batch, num_segments=B)
    norm_class_w = class_w / batch_total[cluster_batch]
    far = batch_total / site_area

    def smooth_l1(pred, target):
        d = pred - target
        ad = jnp.abs(d)
        return jnp.mean(jnp.where(ad < 1.0, 0.5 * d * d, ad - 0.5))

    tr_loss = tr_weight * smooth_l1(norm_class_w, program_target_ratio)
    far_loss = far_weight * smooth_l1(far, far_target)
    return adv + tr_loss + far_loss, adv, tr_loss, far_loss


if __name__ == "__main__":
    # --- small synthetic "graph" consistent with the forward pass -------------
    B, C = 2, 4                     # batch size, program classes per batch
    Ct = B * C                      # total class clusters
    Np, Nv, E, F = 16, 32, 64, 8    # program nodes, voxel nodes, cross edges, feat dim
    N0, N1 = 32, 16                 # rows of the two fake-validity heads
    area_idx = 6
    tr_weight, far_weight = 10.0, 1.0

    key = jax.random.PRNGKey(0)
    ks = jax.random.split(key, 8)
    f32 = jnp.float32
    fv0 = jax.random.normal(ks[0], (N0,), f32)
    fv1 = jax.random.normal(ks[1], (N1,), f32)
    att = jax.random.uniform(ks[2], (E,), f32, 0.05, 1.0)
    mask = (jax.random.uniform(ks[3], (E,), f32) > 0.2).astype(f32)
    vox_feat = jax.random.uniform(ks[4], (Nv, F), f32, 0.5, 1.5)
    far_tgt = jax.random.uniform(ks[5], (B,), f32, 0.5, 2.0)
    site_area = jax.random.uniform(ks[6], (B,), f32, 4.0, 8.0)
    raw_ratio = jax.random.uniform(ks[7], (Ct,), f32, 0.1, 1.0)

    # deterministic graph connectivity
    edge_program = jnp.arange(E) % Np
    edge_voxel = jnp.arange(E) % Nv
    program_batch = jnp.arange(Np) // (Np // B)
    program_cluster = program_batch * C + (jnp.arange(Np) % C)
    cluster_batch = jnp.arange(Ct) // C
    edge_cluster = program_cluster[edge_program]

    # program_target_ratio: normalized to sum to 1 within each batch
    batch_ratio_sum = jax.ops.segment_sum(raw_ratio, cluster_batch, num_segments=B)
    tgt_ratio = raw_ratio / batch_ratio_sum[cluster_batch]

    args = ((fv0, fv1), att, mask, vox_feat, edge_voxel, edge_cluster,
            cluster_batch, tgt_ratio, far_tgt, site_area)
    kwargs = dict(area_index_in_voxel_feature=area_idx,
                  tr_weight=tr_weight, far_weight=far_weight)

    out = volumetric_design_loss_g(*args, **kwargs)
    out = jax.block_until_ready(out)
    ref = _reference(*args, **kwargs)

    for got, want in zip(out, ref):
        assert jnp.allclose(got, want, rtol=1e-3, atol=1e-4), (got, want)

    print("KERNEL_OK")
</pallas_src>

<mosaic_0001>
module attributes {stable_mosaic.version = 11 : i64} {
  func.func @_vdl_g_kernel(%arg0: memref<1x48xf32, #tpu.memory_space<vmem>>, %arg1: memref<3x64xf32, #tpu.memory_space<vmem>>, %arg2: memref<64x18xf32, #tpu.memory_space<vmem>>, %arg3: memref<3x8xf32, #tpu.memory_space<vmem>>, %arg4: memref<1x4xf32, #tpu.memory_space<vmem>>) attributes {dimension_semantics = [], scalar_prefetch = 0 : i64, scratch_operands = 0 : i64, tpu.core_type = #tpu.core_type<tc>} {
    %c0 = arith.constant 0 : index
    %c0_0 = arith.constant 0 : index
    %0 = vector.load %arg0[%c0, %c0_0] : memref<1x48xf32, #tpu.memory_space<vmem>>, vector<1x48xf32>
    %1 = tpu.iota {dimensions = array<i32: 1>} : vector<1x48xi32>
    %c32_i32 = arith.constant 32 : i32
    %2 = vector.broadcast %c32_i32 : i32 to vector<1x48xi32>
    %3 = arith.cmpi slt, %1, %2 : vector<1x48xi32>
    %cst = arith.constant 0.000000e+00 : f32
    %4 = vector.broadcast %cst : f32 to vector<1x48xf32>
    %5 = arith.select %3, %0, %4 : vector<1x48xi1>, vector<1x48xf32>
    %cst_1 = arith.constant dense<0.000000e+00> : vector<1xf32>
    %6 = vector.multi_reduction <add>, %5, %cst_1 [1] : vector<1x48xf32> to vector<1xf32>
    %7 = vector.shape_cast %6 : vector<1xf32> to vector<1x1xf32>
    %c32_i32_2 = arith.constant 32 : i32
    %8 = vector.broadcast %c32_i32_2 : i32 to vector<1x48xi32>
    %9 = arith.cmpi sge, %1, %8 : vector<1x48xi32>
    %cst_3 = arith.constant 0.000000e+00 : f32
    %10 = vector.broadcast %cst_3 : f32 to vector<1x48xf32>
    %11 = arith.select %9, %0, %10 : vector<1x48xi1>, vector<1x48xf32>
    %cst_4 = arith.constant dense<0.000000e+00> : vector<1xf32>
    %12 = vector.multi_reduction <add>, %11, %cst_4 [1] : vector<1x48xf32> to vector<1xf32>
    %13 = vector.shape_cast %12 : vector<1xf32> to vector<1x1xf32>
    %cst_5 = arith.constant 3.125000e-02 : f32
    %14 = vector.broadcast %cst_5 : f32 to vector<1x1xf32>
    %15 = arith.mulf %7, %14 : vector<1x1xf32>
    %cst_6 = arith.constant 0.000000e+00 : f32
    %16 = vector.broadcast %cst_6 : f32 to vector<1x1xf32>
    %17 = arith.subf %16, %15 : vector<1x1xf32>
    %cst_7 = arith.constant 6.250000e-02 : f32
    %18 = vector.broadcast %cst_7 : f32 to vector<1x1xf32>
    %19 = arith.mulf %13, %18 : vector<1x1xf32>
    %20 = arith.subf %17, %19 : vector<1x1xf32>
    %c0_8 = arith.constant 0 : index
    %c0_9 = arith.constant 0 : index
    %21 = vector.load %arg1[%c0_8, %c0_9] : memref<3x64xf32, #tpu.memory_space<vmem>>, vector<1x64xf32>
    %c1 = arith.constant 1 : index
    %c0_10 = arith.constant 0 : index
    %22 = vector.load %arg1[%c1, %c0_10] : memref<3x64xf32, #tpu.memory_space<vmem>>, vector<1x64xf32>
    %c2 = arith.constant 2 : index
    %c0_11 = arith.constant 0 : index
    %23 = vector.load %arg1[%c2, %c0_11] : memref<3x64xf32, #tpu.memory_space<vmem>>, vector<1x64xf32>
    %24 = arith.mulf %21, %23 : vector<1x64xf32>
    %25 = arith.mulf %24, %22 : vector<1x64xf32>
    %c0_12 = arith.constant 0 : index
    %c0_13 = arith.constant 0 : index
    %26 = vector.load %arg2[%c0_12, %c0_13] : memref<64x18xf32, #tpu.memory_space<vmem>>, vector<64x18xf32>
    %cst_14 = arith.constant dense<0.000000e+00> : vector<1x18xf32>
    %27 = tpu.matmul %25, %26, %cst_14 {dimension_numbers = #tpu.dot_dimension_numbers<[1], [0], [0], [1], [0, 0, 1, 1], [], []>, precision = #tpu.contract_precision<fp32>} : vector<1x64xf32>, vector<64x18xf32>, vector<1x18xf32> -> vector<1x18xf32>
    %28 = vector.extract_strided_slice %27 {offsets = [0, 0], sizes = [1, 8], strides = [1, 1]} : vector<1x18xf32> to vector<1x8xf32>
    %29 = vector.extract_strided_slice %27 {offsets = [0, 8], sizes = [1, 8], strides = [1, 1]} : vector<1x18xf32> to vector<1x8xf32>
    %30 = vector.extract_strided_slice %27 {offsets = [0, 16], sizes = [1, 2], strides = [1, 1]} : vector<1x18xf32> to vector<1x2xf32>
    %c0_15 = arith.constant 0 : index
    %c0_16 = arith.constant 0 : index
    %31 = vector.load %arg3[%c0_15, %c0_16] : memref<3x8xf32, #tpu.memory_space<vmem>>, vector<1x8xf32>
    %c1_17 = arith.constant 1 : index
    %c0_18 = arith.constant 0 : index
    %32 = vector.load %arg3[%c1_17, %c0_18] : memref<3x8xf32, #tpu.memory_space<vmem>>, vector<1x8xf32>
    %33 = vector.extract_strided_slice %32 {offsets = [0, 0], sizes = [1, 2], strides = [1, 1]} : vector<1x8xf32> to vector<1x2xf32>
    %c2_19 = arith.constant 2 : index
    %c0_20 = arith.constant 0 : index
    %34 = vector.load %arg3[%c2_19, %c0_20] : memref<3x8xf32, #tpu.memory_space<vmem>>, vector<1x8xf32>
    %35 = vector.extract_strided_slice %34 {offsets = [0, 0], sizes = [1, 2], strides = [1, 1]} : vector<1x8xf32> to vector<1x2xf32>
    %36 = arith.divf %28, %29 : vector<1x8xf32>
    %37 = arith.divf %30, %35 : vector<1x2xf32>
    %38 = arith.subf %36, %31 : vector<1x8xf32>
    %39 = math.absf %38 : vector<1x8xf32>
    %cst_21 = arith.constant 1.000000e+00 : f32
    %40 = vector.broadcast %cst_21 : f32 to vector<1x8xf32>
    %41 = arith.cmpf olt, %39, %40 : vector<1x8xf32>
    %cst_22 = arith.constant 5.000000e-01 : f32
    %42 = vector.broadcast %cst_22 : f32 to vector<1x8xf32>
    %43 = arith.mulf %42, %38 : vector<1x8xf32>
    %44 = arith.mulf %43, %38 : vector<1x8xf32>
    %cst_23 = arith.constant 5.000000e-01 : f32
    %45 = vector.broadcast %cst_23 : f32 to vector<1x8xf32>
    %46 = arith.subf %39, %45 : vector<1x8xf32>
    %47 = arith.select %41, %44, %46 : vector<1x8xi1>, vector<1x8xf32>
    %cst_24 = arith.constant dense<0.000000e+00> : vector<1xf32>
    %48 = vector.multi_reduction <add>, %47, %cst_24 [1] : vector<1x8xf32> to vector<1xf32>
    %49 = vector.shape_cast %48 : vector<1xf32> to vector<1x1xf32>
    %cst_25 = arith.constant 1.250000e-01 : f32
    %50 = vector.broadcast %cst_25 : f32 to vector<1x1xf32>
    %51 = arith.mulf %49, %50 : vector<1x1xf32>
    %cst_26 = arith.constant 1.000000e+01 : f32
    %52 = vector.broadcast %cst_26 : f32 to vector<1x1xf32>
    %53 = arith.mulf %52, %51 : vector<1x1xf32>
    %54 = arith.subf %37, %33 : vector<1x2xf32>
    %55 = math.absf %54 : vector<1x2xf32>
    %cst_27 = arith.constant 1.000000e+00 : f32
    %56 = vector.broadcast %cst_27 : f32 to vector<1x2xf32>
    %57 = arith.cmpf olt, %55, %56 : vector<1x2xf32>
    %cst_28 = arith.constant 5.000000e-01 : f32
    %58 = vector.broadcast %cst_28 : f32 to vector<1x2xf32>
    %59 = arith.mulf %58, %54 : vector<1x2xf32>
    %60 = arith.mulf %59, %54 : vector<1x2xf32>
    %cst_29 = arith.constant 5.000000e-01 : f32
    %61 = vector.broadcast %cst_29 : f32 to vector<1x2xf32>
    %62 = arith.subf %55, %61 : vector<1x2xf32>
    %63 = arith.select %57, %60, %62 : vector<1x2xi1>, vector<1x2xf32>
    %cst_30 = arith.constant dense<0.000000e+00> : vector<1xf32>
    %64 = vector.multi_reduction <add>, %63, %cst_30 [1] : vector<1x2xf32> to vector<1xf32>
    %65 = vector.shape_cast %64 : vector<1xf32> to vector<1x1xf32>
    %cst_31 = arith.constant 5.000000e-01 : f32
    %66 = vector.broadcast %cst_31 : f32 to vector<1x1xf32>
    %67 = arith.mulf %65, %66 : vector<1x1xf32>
    %cst_32 = arith.constant 1.000000e+00 : f32
    %68 = vector.broadcast %cst_32 : f32 to vector<1x1xf32>
    %69 = arith.mulf %68, %67 : vector<1x1xf32>
    %70 = arith.addf %20, %53 : vector<1x1xf32>
    %71 = arith.addf %70, %69 : vector<1x1xf32>
    %72 = tpu.iota {dimensions = array<i32: 1>} : vector<1x4xi32>
    %c0_i32 = arith.constant 0 : i32
    %73 = vector.broadcast %c0_i32 : i32 to vector<1x4xi32>
    %74 = arith.cmpi eq, %72, %73 : vector<1x4xi32>
    %cst_33 = arith.constant 0.000000e+00 : f32
    %75 = vector.shape_cast %71 : vector<1x1xf32> to vector<1x1xf32>
    %76 = vector.broadcast %75 : vector<1x1xf32> to vector<1x4xf32>
    %77 = vector.broadcast %cst_33 : f32 to vector<1x4xf32>
    %78 = arith.select %74, %76, %77 : vector<1x4xi1>, vector<1x4xf32>
    %c1_i32 = arith.constant 1 : i32
    %79 = vector.broadcast %c1_i32 : i32 to vector<1x4xi32>
    %80 = arith.cmpi eq, %72, %79 : vector<1x4xi32>
    %cst_34 = arith.constant 0.000000e+00 : f32
    %81 = vector.shape_cast %20 : vector<1x1xf32> to vector<1x1xf32>
    %82 = vector.broadcast %81 : vector<1x1xf32> to vector<1x4xf32>
    %83 = vector.broadcast %cst_34 : f32 to vector<1x4xf32>
    %84 = arith.select %80, %82, %83 : vector<1x4xi1>, vector<1x4xf32>
    %85 = arith.addf %78, %84 : vector<1x4xf32>
    %c2_i32 = arith.constant 2 : i32
    %86 = vector.broadcast %c2_i32 : i32 to vector<1x4xi32>
    %87 = arith.cmpi eq, %72, %86 : vector<1x4xi32>
    %cst_35 = arith.constant 0.000000e+00 : f32
    %88 = vector.shape_cast %53 : vector<1x1xf32> to vector<1x1xf32>
    %89 = vector.broadcast %88 : vector<1x1xf32> to vector<1x4xf32>
    %90 = vector.broadcast %cst_35 : f32 to vector<1x4xf32>
    %91 = arith.select %87, %89, %90 : vector<1x4xi1>, vector<1x4xf32>
    %92 = arith.addf %85, %91 : vector<1x4xf32>
    %c3_i32 = arith.constant 3 : i32
    %93 = vector.broadcast %c3_i32 : i32 to vector<1x4xi32>
    %94 = arith.cmpi eq, %72, %93 : vector<1x4xi32>
    %cst_36 = arith.constant 0.000000e+00 : f32
    %95 = vector.shape_cast %69 : vector<1x1xf32> to vector<1x1xf32>
    %96 = vector.broadcast %95 : vector<1x1xf32> to vector<1x4xf32>
    %97 = vector.broadcast %cst_36 : f32 to vector<1x4xf32>
    %98 = arith.select %94, %96, %97 : vector<1x4xi1>, vector<1x4xf32>
    %99 = arith.addf %92, %98 : vector<1x4xf32>
    %c0_37 = arith.constant 0 : index
    %c0_38 = arith.constant 0 : index
    %100 = vector.load %arg4[%c0_37, %c0_38] : memref<1x4xf32, #tpu.memory_space<vmem>>, vector<1x4xf32>
    tpu.vector_store %arg4[%c0_37, %c0_38], %99 {strides = array<i32>} : memref<1x4xf32, #tpu.memory_space<vmem>>, vector<1x4xf32>,
    return
  }
}

</mosaic_0001>

<llo_original>
// kernel: tpu_custom_call.1
$region0: #{tpu_custom_call.1}
  #allocation0 [shape = 'u32[]', space=smem, size = 0x4, offset = 0x4, fixed_abs, tag = 'smem constant byte address 0x4 - core index']
  #allocation1 [shape = 'u32[144,128]{1,0:T(1,128)}', space=vmem, size = 0x12000, scoped, tag = 'internal scratch']
  %s0 = inlined_call_operand.vmem [shape: f32[1,48], index: 0, kind: input, shape index: {}]
  %s1 = inlined_call_operand.vmem [shape: f32[3,64], index: 1, kind: input, shape index: {}]
  %s2 = inlined_call_operand.vmem [shape: f32[64,18], index: 2, kind: input, shape index: {}]
  %s3 = inlined_call_operand.vmem [shape: f32[3,8], index: 3, kind: input, shape index: {}]
  %s4 = inlined_call_operand.hbm [shape: f32[1,4], index: 4, kind: output, shape index: {}]
  %s5 = sld [smem:[#allocation0]]
  $region26: #{tpu_custom_call.1} parent=0
    _
  %s7 = ssub.s32 1, %s5
  %s8 = scalar_select 0, %s7, %s5
  $region1: #{tpu_custom_call.1} parent=0
    #allocation2 [shape = 'u8[512]{0}', space=vmem, size = 0x400, scoped, tag = 'output window, operand 0, single buffered']
    #allocation3 [shape = 's32[1]{0}', space=sflag, size = 0x4, scoped, tag = 'scoped memory for tpu_custom_call.1']
    %9 = vsyncpa [#allocation3], 0
    // Predicated region
    $region2: #{tpu_custom_call.1} parent=1 // pred_check
      _
    $region3: #{tpu_custom_call.1} parent=1 // pred_check_branch
      %11 = sbr.rel (0) target = $region5
    $region4: #{tpu_custom_call.1} parent=1 // pred_region
      _
    $region5: #{tpu_custom_call.1} parent=1 // pred_fallthru
      _
    // Predicated region
    $region6: #{tpu_custom_call.1} parent=1 // pred_check
      _
    $region7: #{tpu_custom_call.1} parent=1 // pred_check_branch
      %13 = sbr.rel (0) target = $region9
    $region8: #{tpu_custom_call.1} parent=1 // pred_region
      _
    $region9: #{tpu_custom_call.1} parent=1 // pred_fallthru
      _
    // Predicated region
    $region10: #{tpu_custom_call.1} parent=1 // pred_check
      _
    $region11: #{tpu_custom_call.1} parent=1 // pred_check_branch
      %15 = sbr.rel (0) target = $region13
    $region12: #{tpu_custom_call.1} parent=1 // pred_region
      _
    $region13: #{tpu_custom_call.1} parent=1 // pred_fallthru
      _
    // Predicated region
    $region14: #{tpu_custom_call.1} parent=1 // pred_check
      _
    $region15: #{tpu_custom_call.1} parent=1 // pred_check_branch
      %17 = sbr.rel (0) target = $region17
    $region16: #{tpu_custom_call.1} parent=1 // pred_region
      _
    $region17: #{tpu_custom_call.1} parent=1 // pred_fallthru
      _
    %v18 = vld [vmem:[%s0] sm:$0x1]
    %v19 = vlaneseq
    %v20 = vand.u32 %v19, 127
    %vm21 = vcmp.lt.s32.totalorder %v20, 32
    %v22 = vsel %vm21, %v18, 0.0
    %vm23 = vcmask 385024
    %v24 = vsel %vm23, %v22, 0.0
    %25 = vadd.xlane.f32.xlu0 %v24
    %v26 = vpop.xlane.xlu0 %25
    %vm27 = vcmp.ge.s32.totalorder %v20, 32
    %v28 = vsel %vm27, %v18, 0.0
    %v29 = vsel %vm23, %v28, 0.0
    %30 = vadd.xlane.f32.xlu0 %v29
    %v31 = vpop.xlane.xlu0 %30
    %v32 = vmul.f32 %v26, 0.03125
    %v33 = vsub.f32 0.0, %v32
    %v34 = vmul.f32 %v31, 0.0625
    %v35 = vsub.f32 %v33, %v34
    %v36 = vld [vmem:[%s1] sm:$0x1]
    %v37 = vld [vmem:[%s1 + $0x1] sm:$0x1]
    %v38 = vld [vmem:[%s1 + $0x2] sm:$0x1]
    %v39 = vmul.f32 %v36, %v38
    %v40 = vmul.f32 %v39, %v37
    %v41 = vld [vmem:[%s2] sm:$0xff]
    %v42 = vld [vmem:[%s2 + $0x8] sm:$0xff]
    %v43 = vld [vmem:[%s2 + $0x10] sm:$0xff]
    %v44 = vld [vmem:[%s2 + $0x18] sm:$0xff]
    %v45 = vld [vmem:[%s2 + $0x20] sm:$0xff]
    %v46 = vld [vmem:[%s2 + $0x28] sm:$0xff]
    %v47 = vld [vmem:[%s2 + $0x30] sm:$0xff]
    %v48 = vld [vmem:[%s2 + $0x38] sm:$0xff]
    %vm49 = vcmask 523264
    %v51 = vsel %vm49, %v40, 0
    %53 = vmatprep.subr.mxu0 0.0
    %v54 = vand.u32 %v41, 4294901760
    %55 = vmatpush1.msra.mxu0 %v54
    %56 = vmatprep.subr.mxu0 0.0
    %v57 = vand.u32 %v42, 4294901760
    %58 = vmatpush1.msra.mxu0 %v57
    %59 = vmatprep.subr.mxu0 0.0
    %v60 = vand.u32 %v43, 4294901760
    %61 = vmatpush1.msra.mxu0 %v60
    %62 = vmatprep.subr.mxu0 0.0
    %v63 = vand.u32 %v44, 4294901760
    %64 = vmatpush1.msra.mxu0 %v63
    %65 = vmatprep.subr.mxu0 0.0
    %v66 = vand.u32 %v45, 4294901760
    %67 = vmatpush1.msra.mxu0 %v66
    %68 = vmatprep.subr.mxu0 0.0
    %v69 = vand.u32 %v46, 4294901760
    %70 = vmatpush1.msra.mxu0 %v69
    %71 = vmatprep.subr.mxu0 0.0
    %v72 = vand.u32 %v47, 4294901760
    %73 = vmatpush1.msra.mxu0 %v72
    %74 = vmatprep.subr.mxu0 0.0
    %v75 = vand.u32 %v48, 4294901760
    %76 = vmatpush1.msra.mxu0 %v75
    %77 = vmatprep.subr.mxu0 0.0
    %78 = vmatpush1.msra.mxu0 0.0
    %79 = vmatprep.subr.mxu0 0.0
    %80 = vmatpush1.msra.mxu0 0.0
    %81 = vmatprep.subr.mxu0 0.0
    %82 = vmatpush1.msra.mxu0 0.0
    %83 = vmatprep.subr.mxu0 0.0
    %84 = vmatpush1.msra.mxu0 0.0
    %85 = vmatprep.subr.mxu0 0.0
    %86 = vmatpush1.msra.mxu0 0.0
    %87 = vmatprep.subr.mxu0 0.0
    %88 = vmatpush1.msra.mxu0 0.0
    %89 = vmatprep.subr.mxu0 0.0
    %90 = vmatpush1.msra.mxu0 0.0
    %91 = vmatprep.subr.mxu0 0.0
    %92 = vmatpush1.msra.mxu0 0.0
    %93 = vmatprep.subr.mxu0 0.0
    %94 = vmatpush1.msra.mxu0 0.0
    %95 = vmatprep.subr.mxu0 0.0
    %96 = vmatpush1.msra.mxu0 0.0
    %97 = vmatprep.subr.mxu0 0.0
    %98 = vmatpush1.msra.mxu0 0.0
    %99 = vmatprep.subr.mxu0 0.0
    %100 = vmatpush1.msra.mxu0 0.0
    %101 = vmatprep.subr.mxu0 0.0
    %102 = vmatpush1.msra.mxu0 0.0
    %103 = vmatprep.subr.mxu0 0.0
    %104 = vmatpush1.msra.mxu0 0.0
    %105 = vmatprep.subr.mxu0 0.0
    %106 = vmatpush1.msra.mxu0 0.0
    %107 = vmatprep.subr.mxu0 0.0
    %108 = vmatpush1.msra.mxu0 0.0
    %109 = vmatprep.subr.mxu0 0.0
    %110 = vmatpush1.msra.mxu0 0.0
    %111 = vmatprep.subr.mxu0 0.0
    %112 = vmatpush1.msra.mxu0 0.0
    %113 = vmatprep.subr.mxu0 0.0
    %114 = vmatpush1.msra.mxu0 0.0
    %115 = vmatprep.subr.mxu0 0.0
    %116 = vmatpush1.msra.mxu0 0.0
    %117 = vmatprep.subr.mxu0 0.0
    %118 = vmatpush1.msra.mxu0 0.0
    %119 = vmatprep.subr.mxu0 0.0
    %120 = vmatpush1.msra.mxu0 0.0
    %121 = vmatprep.subr.mxu0 0.0
    %122 = vmatpush1.msra.mxu0 0.0
    %123 = vmatprep.subr.mxu0 0.0
    %124 = vmatpush1.msra.mxu0 0.0
    %125 = vmatprep.mubr.f32.mxu0 0.0
    %v126 = vand.u32 %v51, 4294901760
    %v127 = vsub.f32 %v51, %v126
    %v128 = vand.u32 %v127, 4294901760
    %v129 = vsub.f32 %v127, %v128
    %v130 = vand.u32 %v129, 4294901760
    %131 = vmatmul.mubr.f32.gmra.mrb[0].mxu0 %v130
    %v132 = vpop.f32.mrb[0].mxu0
    %v133 = vadd.f32 0.0, %v132
    %v134 = vpop.f32.mrb[0].mxu0
    %135 = vdwg.mxu0
    %136 = vmatprep.subr.mxu0 0.0
    %v137 = vand.u32 %v41, 4294901760
    %v138 = vsub.f32 %v41, %v137
    %v139 = vand.u32 %v138, 4294901760
    %v140 = vsub.f32 %v138, %v139
    %v141 = vand.u32 %v140, 4294901760
    %142 = vmatpush1.msra.mxu0 %v141
    %143 = vmatprep.subr.mxu0 0.0
    %v144 = vand.u32 %v42, 4294901760
    %v145 = vsub.f32 %v42, %v144
    %v146 = vand.u32 %v145, 4294901760
    %v147 = vsub.f32 %v145, %v146
    %v148 = vand.u32 %v147, 4294901760
    %149 = vmatpush1.msra.mxu0 %v148
    %150 = vmatprep.subr.mxu0 0.0
    %v151 = vand.u32 %v43, 4294901760
    %v152 = vsub.f32 %v43, %v151
    %v153 = vand.u32 %v152, 4294901760
    %v154 = vsub.f32 %v152, %v153
    %v155 = vand.u32 %v154, 4294901760
    %156 = vmatpush1.msra.mxu0 %v155
    %157 = vmatprep.subr.mxu0 0.0
    %v158 = vand.u32 %v44, 4294901760
    %v159 = vsub.f32 %v44, %v158
    %v160 = vand.u32 %v159, 4294901760
    %v161 = vsub.f32 %v159, %v160
    %v162 = vand.u32 %v161, 4294901760
    %163 = vmatpush1.msra.mxu0 %v162
    %164 = vmatprep.subr.mxu0 0.0
    %v165 = vand.u32 %v45, 4294901760
    %v166 = vsub.f32 %v45, %v165
    %v167 = vand.u32 %v166, 4294901760
    %v168 = vsub.f32 %v166, %v167
    %v169 = vand.u32 %v168, 4294901760
    %170 = vmatpush1.msra.mxu0 %v169
    %171 = vmatprep.subr.mxu0 0.0
    %v172 = vand.u32 %v46, 4294901760
    %v173 = vsub.f32 %v46, %v172
    %v174 = vand.u32 %v173, 4294901760
    %v175 = vsub.f32 %v173, %v174
    %v176 = vand.u32 %v175, 4294901760
    %177 = vmatpush1.msra.mxu0 %v176
    %178 = vmatprep.subr.mxu0 0.0
    %v179 = vand.u32 %v47, 4294901760
    %v180 = vsub.f32 %v47, %v179
    %v181 = vand.u32 %v180, 4294901760
    %v182 = vsub.f32 %v180, %v181
    %v183 = vand.u32 %v182, 4294901760
    %184 = vmatpush1.msra.mxu0 %v183
    %185 = vmatprep.subr.mxu0 0.0
    %v186 = vand.u32 %v48, 4294901760
    %v187 = vsub.f32 %v48, %v186
    %v188 = vand.u32 %v187, 4294901760
    %v189 = vsub.f32 %v187, %v188
    %v190 = vand.u32 %v189, 4294901760
    %191 = vmatpush1.msra.mxu0 %v190
    %192 = vmatprep.subr.mxu0 0.0
    %193 = vmatpush1.msra.mxu0 0.0
    %194 = vmatprep.subr.mxu0 0.0
    %195 = vmatpush1.msra.mxu0 0.0
    %196 = vmatprep.subr.mxu0 0.0
    %197 = vmatpush1.msra.mxu0 0.0
    %198 = vmatprep.subr.mxu0 0.0
    %199 = vmatpush1.msra.mxu0 0.0
    %200 = vmatprep.subr.mxu0 0.0
    %201 = vmatpush1.msra.mxu0 0.0
    %202 = vmatprep.subr.mxu0 0.0
    %203 = vmatpush1.msra.mxu0 0.0
    %204 = vmatprep.subr.mxu0 0.0
    %205 = vmatpush1.msra.mxu0 0.0
    %206 = vmatprep.subr.mxu0 0.0
    %207 = vmatpush1.msra.mxu0 0.0
    %208 = vmatprep.subr.mxu0 0.0
    %209 = vmatpush1.msra.mxu0 0.0
    %210 = vmatprep.subr.mxu0 0.0
    %211 = vmatpush1.msra.mxu0 0.0
    %212 = vmatprep.subr.mxu0 0.0
    %213 = vmatpush1.msra.mxu0 0.0
    %214 = vmatprep.subr.mxu0 0.0
    %215 = vmatpush1.msra.mxu0 0.0
    %216 = vmatprep.subr.mxu0 0.0
    %217 = vmatpush1.msra.mxu0 0.0
    %218 = vmatprep.subr.mxu0 0.0
    %219 = vmatpush1.msra.mxu0 0.0
    %220 = vmatprep.subr.mxu0 0.0
    %221 = vmatpush1.msra.mxu0 0.0
    %222 = vmatprep.subr.mxu0 0.0
    %223 = vmatpush1.msra.mxu0 0.0
    %224 = vmatprep.subr.mxu0 0.0
    %225 = vmatpush1.msra.mxu0 0.0
    %226 = vmatprep.subr.mxu0 0.0
    %227 = vmatpush1.msra.mxu0 0.0
    %228 = vmatprep.subr.mxu0 0.0
    %229 = vmatpush1.msra.mxu0 0.0
    %230 = vmatprep.subr.mxu0 0.0
    %231 = vmatpush1.msra.mxu0 0.0
    %232 = vmatprep.subr.mxu0 0.0
    %233 = vmatpush1.msra.mxu0 0.0
    %234 = vmatprep.subr.mxu0 0.0
    %235 = vmatpush1.msra.mxu0 0.0
    %236 = vmatprep.subr.mxu0 0.0
    %237 = vmatpush1.msra.mxu0 0.0
    %238 = vmatprep.subr.mxu0 0.0
    %239 = vmatpush1.msra.mxu0 0.0
    %240 = vmatprep.mubr.f32.mxu0 0.0
    %v241 = vand.u32 %v51, 4294901760
    %242 = vmatmul.mubr.f32.gmra.mrb[0].mxu0 %v241
    %v243 = vpop.f32.mrb[0].mxu0
    %v244 = vadd.f32 %v133, %v243
    %v245 = vpop.f32.mrb[0].mxu0
    %246 = vdwg.mxu0
    %247 = vmatprep.subr.mxu0 0.0
    %v248 = vand.u32 %v41, 4294901760
    %v249 = vsub.f32 %v41, %v248
    %250 = vmatpush1.msra.mxu0 %v249
    %251 = vmatprep.subr.mxu0 0.0
    %v252 = vand.u32 %v42, 4294901760
    %v253 = vsub.f32 %v42, %v252
    %254 = vmatpush1.msra.mxu0 %v253
    %255 = vmatprep.subr.mxu0 0.0
    %v256 = vand.u32 %v43, 4294901760
    %v257 = vsub.f32 %v43, %v256
    %258 = vmatpush1.msra.mxu0 %v257
    %259 = vmatprep.subr.mxu0 0.0
    %v260 = vand.u32 %v44, 4294901760
    %v261 = vsub.f32 %v44, %v260
    %262 = vmatpush1.msra.mxu0 %v261
    %263 = vmatprep.subr.mxu0 0.0
    %v264 = vand.u32 %v45, 4294901760
    %v265 = vsub.f32 %v45, %v264
    %266 = vmatpush1.msra.mxu0 %v265
    %267 = vmatprep.subr.mxu0 0.0
    %v268 = vand.u32 %v46, 4294901760
    %v269 = vsub.f32 %v46, %v268
    %270 = vmatpush1.msra.mxu0 %v269
    %271 = vmatprep.subr.mxu0 0.0
    %v272 = vand.u32 %v47, 4294901760
    %v273 = vsub.f32 %v47, %v272
    %274 = vmatpush1.msra.mxu0 %v273
    %275 = vmatprep.subr.mxu0 0.0
    %v276 = vand.u32 %v48, 4294901760
    %v277 = vsub.f32 %v48, %v276
    %278 = vmatpush1.msra.mxu0 %v277
    %279 = vmatprep.subr.mxu0 0.0
    %280 = vmatpush1.msra.mxu0 0.0
    %281 = vmatprep.subr.mxu0 0.0
    %282 = vmatpush1.msra.mxu0 0.0
    %283 = vmatprep.subr.mxu0 0.0
    %284 = vmatpush1.msra.mxu0 0.0
    %285 = vmatprep.subr.mxu0 0.0
    %286 = vmatpush1.msra.mxu0 0.0
    %287 = vmatprep.subr.mxu0 0.0
    %288 = vmatpush1.msra.mxu0 0.0
    %289 = vmatprep.subr.mxu0 0.0
    %290 = vmatpush1.msra.mxu0 0.0
    %291 = vmatprep.subr.mxu0 0.0
    %292 = vmatpush1.msra.mxu0 0.0
    %293 = vmatprep.subr.mxu0 0.0
    %294 = vmatpush1.msra.mxu0 0.0
    %295 = vmatprep.subr.mxu0 0.0
    %296 = vmatpush1.msra.mxu0 0.0
    %297 = vmatprep.subr.mxu0 0.0
    %298 = vmatpush1.msra.mxu0 0.0
    %299 = vmatprep.subr.mxu0 0.0
    %300 = vmatpush1.msra.mxu0 0.0
    %301 = vmatprep.subr.mxu0 0.0
    %302 = vmatpush1.msra.mxu0 0.0
    %303 = vmatprep.subr.mxu0 0.0
    %304 = vmatpush1.msra.mxu0 0.0
    %305 = vmatprep.subr.mxu0 0.0
    %306 = vmatpush1.msra.mxu0 0.0
    %307 = vmatprep.subr.mxu0 0.0
    %308 = vmatpush1.msra.mxu0 0.0
    %309 = vmatprep.subr.mxu0 0.0
    %310 = vmatpush1.msra.mxu0 0.0
    %311 = vmatprep.subr.mxu0 0.0
    %312 = vmatpush1.msra.mxu0 0.0
    %313 = vmatprep.subr.mxu0 0.0
    %314 = vmatpush1.msra.mxu0 0.0
    %315 = vmatprep.subr.mxu0 0.0
    %316 = vmatpush1.msra.mxu0 0.0
    %317 = vmatprep.subr.mxu0 0.0
    %318 = vmatpush1.msra.mxu0 0.0
    %319 = vmatprep.subr.mxu0 0.0
    %320 = vmatpush1.msra.mxu0 0.0
    %321 = vmatprep.subr.mxu0 0.0
    %322 = vmatpush1.msra.mxu0 0.0
    %323 = vmatprep.subr.mxu0 0.0
    %324 = vmatpush1.msra.mxu0 0.0
    %325 = vmatprep.subr.mxu0 0.0
    %326 = vmatpush1.msra.mxu0 0.0
    %327 = vmatprep.mubr.f32.mxu0 0.0
    %v328 = vand.u32 %v51, 4294901760
    %v329 = vsub.f32 %v51, %v328
    %330 = vmatmul.mubr.f32.gmra.mrb[0].mxu0 %v329
    %v331 = vpop.f32.mrb[0].mxu0
    %v332 = vadd.f32 %v244, %v331
    %v333 = vpop.f32.mrb[0].mxu0
    %334 = vdwg.mxu0
    %335 = vmatprep.subr.mxu0 0.0
    %v336 = vand.u32 %v41, 4294901760
    %337 = vmatpush1.msra.mxu0 %v336
    %338 = vmatprep.subr.mxu0 0.0
    %v339 = vand.u32 %v42, 4294901760
    %340 = vmatpush1.msra.mxu0 %v339
    %341 = vmatprep.subr.mxu0 0.0
    %v342 = vand.u32 %v43, 4294901760
    %343 = vmatpush1.msra.mxu0 %v342
    %344 = vmatprep.subr.mxu0 0.0
    %v345 = vand.u32 %v44, 4294901760
    %346 = vmatpush1.msra.mxu0 %v345
    %347 = vmatprep.subr.mxu0 0.0
    %v348 = vand.u32 %v45, 4294901760
    %349 = vmatpush1.msra.mxu0 %v348
    %350 = vmatprep.subr.mxu0 0.0
    %v351 = vand.u32 %v46, 4294901760
    %352 = vmatpush1.msra.mxu0 %v351
    %353 = vmatprep.subr.mxu0 0.0
    %v354 = vand.u32 %v47, 4294901760
    %355 = vmatpush1.msra.mxu0 %v354
    %356 = vmatprep.subr.mxu0 0.0
    %v357 = vand.u32 %v48, 4294901760
    %358 = vmatpush1.msra.mxu0 %v357
    %359 = vmatprep.subr.mxu0 0.0
    %360 = vmatpush1.msra.mxu0 0.0
    %361 = vmatprep.subr.mxu0 0.0
    %362 = vmatpush1.msra.mxu0 0.0
    %363 = vmatprep.subr.mxu0 0.0
    %364 = vmatpush1.msra.mxu0 0.0
    %365 = vmatprep.subr.mxu0 0.0
    %366 = vmatpush1.msra.mxu0 0.0
    %367 = vmatprep.subr.mxu0 0.0
    %368 = vmatpush1.msra.mxu0 0.0
    %369 = vmatprep.subr.mxu0 0.0
    %370 = vmatpush1.msra.mxu0 0.0
    %371 = vmatprep.subr.mxu0 0.0
    %372 = vmatpush1.msra.mxu0 0.0
    %373 = vmatprep.subr.mxu0 0.0
    %374 = vmatpush1.msra.mxu0 0.0
    %375 = vmatprep.subr.mxu0 0.0
    %376 = vmatpush1.msra.mxu0 0.0
    %377 = vmatprep.subr.mxu0 0.0
    %378 = vmatpush1.msra.mxu0 0.0
    %379 = vmatprep.subr.mxu0 0.0
    %380 = vmatpush1.msra.mxu0 0.0
    %381 = vmatprep.subr.mxu0 0.0
    %382 = vmatpush1.msra.mxu0 0.0
    %383 = vmatprep.subr.mxu0 0.0
    %384 = vmatpush1.msra.mxu0 0.0
    %385 = vmatprep.subr.mxu0 0.0
    %386 = vmatpush1.msra.mxu0 0.0
    %387 = vmatprep.subr.mxu0 0.0
    %388 = vmatpush1.msra.mxu0 0.0
    %389 = vmatprep.subr.mxu0 0.0
    %390 = vmatpush1.msra.mxu0 0.0
    %391 = vmatprep.subr.mxu0 0.0
    %392 = vmatpush1.msra.mxu0 0.0
    %393 = vmatprep.subr.mxu0 0.0
    %394 = vmatpush1.msra.mxu0 0.0
    %395 = vmatprep.subr.mxu0 0.0
    %396 = vmatpush1.msra.mxu0 0.0
    %397 = vmatprep.subr.mxu0 0.0
    %398 = vmatpush1.msra.mxu0 0.0
    %399 = vmatprep.subr.mxu0 0.0
    %400 = vmatpush1.msra.mxu0 0.0
    %401 = vmatprep.subr.mxu0 0.0
    %402 = vmatpush1.msra.mxu0 0.0
    %403 = vmatprep.subr.mxu0 0.0
    %404 = vmatpush1.msra.mxu0 0.0
    %405 = vmatprep.subr.mxu0 0.0
    %406 = vmatpush1.msra.mxu0 0.0
    %407 = vmatprep.mubr.f32.mxu0 0.0
    %v408 = vand.u32 %v51, 4294901760
    %v409 = vsub.f32 %v51, %v408
    %v410 = vand.u32 %v409, 4294901760
    %411 = vmatmul.mubr.f32.gmra.mrb[0].mxu0 %v410
    %v412 = vpop.f32.mrb[0].mxu0
    %v413 = vadd.f32 %v332, %v412
    %v414 = vpop.f32.mrb[0].mxu0
    %415 = vdwg.mxu0
    %416 = vmatprep.subr.mxu0 0.0
    %v417 = vand.u32 %v41, 4294901760
    %v418 = vsub.f32 %v41, %v417
    %v419 = vand.u32 %v418, 4294901760
    %420 = vmatpush1.msra.mxu0 %v419
    %421 = vmatprep.subr.mxu0 0.0
    %v422 = vand.u32 %v42, 4294901760
    %v423 = vsub.f32 %v42, %v422
    %v424 = vand.u32 %v423, 4294901760
    %425 = vmatpush1.msra.mxu0 %v424
    %426 = vmatprep.subr.mxu0 0.0
    %v427 = vand.u32 %v43, 4294901760
    %v428 = vsub.f32 %v43, %v427
    %v429 = vand.u32 %v428, 4294901760
    %430 = vmatpush1.msra.mxu0 %v429
    %431 = vmatprep.subr.mxu0 0.0
    %v432 = vand.u32 %v44, 4294901760
    %v433 = vsub.f32 %v44, %v432
    %v434 = vand.u32 %v433, 4294901760
    %435 = vmatpush1.msra.mxu0 %v434
    %436 = vmatprep.subr.mxu0 0.0
    %v437 = vand.u32 %v45, 4294901760
    %v438 = vsub.f32 %v45, %v437
    %v439 = vand.u32 %v438, 4294901760
    %440 = vmatpush1.msra.mxu0 %v439
    %441 = vmatprep.subr.mxu0 0.0
    %v442 = vand.u32 %v46, 4294901760
    %v443 = vsub.f32 %v46, %v442
    %v444 = vand.u32 %v443, 4294901760
    %445 = vmatpush1.msra.mxu0 %v444
    %446 = vmatprep.subr.mxu0 0.0
    %v447 = vand.u32 %v47, 4294901760
    %v448 = vsub.f32 %v47, %v447
    %v449 = vand.u32 %v448, 4294901760
    %450 = vmatpush1.msra.mxu0 %v449
    %451 = vmatprep.subr.mxu0 0.0
    %v452 = vand.u32 %v48, 4294901760
    %v453 = vsub.f32 %v48, %v452
    %v454 = vand.u32 %v453, 4294901760
    %455 = vmatpush1.msra.mxu0 %v454
    %456 = vmatprep.subr.mxu0 0.0
    %457 = vmatpush1.msra.mxu0 0.0
    %458 = vmatprep.subr.mxu0 0.0
    %459 = vmatpush1.msra.mxu0 0.0
    %460 = vmatprep.subr.mxu0 0.0
    %461 = vmatpush1.msra.mxu0 0.0
    %462 = vmatprep.subr.mxu0 0.0
    %463 = vmatpush1.msra.mxu0 0.0
    %464 = vmatprep.subr.mxu0 0.0
    %465 = vmatpush1.msra.mxu0 0.0
    %466 = vmatprep.subr.mxu0 0.0
    %467 = vmatpush1.msra.mxu0 0.0
    %468 = vmatprep.subr.mxu0 0.0
    %469 = vmatpush1.msra.mxu0 0.0
    %470 = vmatprep.subr.mxu0 0.0
    %471 = vmatpush1.msra.mxu0 0.0
    %472 = vmatprep.subr.mxu0 0.0
    %473 = vmatpush1.msra.mxu0 0.0
    %474 = vmatprep.subr.mxu0 0.0
    %475 = vmatpush1.msra.mxu0 0.0
    %476 = vmatprep.subr.mxu0 0.0
    %477 = vmatpush1.msra.mxu0 0.0
    %478 = vmatprep.subr.mxu0 0.0
    %479 = vmatpush1.msra.mxu0 0.0
    %480 = vmatprep.subr.mxu0 0.0
    %481 = vmatpush1.msra.mxu0 0.0
    %482 = vmatprep.subr.mxu0 0.0
    %483 = vmatpush1.msra.mxu0 0.0
    %484 = vmatprep.subr.mxu0 0.0
    %485 = vmatpush1.msra.mxu0 0.0
    %486 = vmatprep.subr.mxu0 0.0
    %487 = vmatpush1.msra.mxu0 0.0
    %488 = vmatprep.subr.mxu0 0.0
    %489 = vmatpush1.msra.mxu0 0.0
    %490 = vmatprep.subr.mxu0 0.0
    %491 = vmatpush1.msra.mxu0 0.0
    %492 = vmatprep.subr.mxu0 0.0
    %493 = vmatpush1.msra.mxu0 0.0
    %494 = vmatprep.subr.mxu0 0.0
    %495 = vmatpush1.msra.mxu0 0.0
    %496 = vmatprep.subr.mxu0 0.0
    %497 = vmatpush1.msra.mxu0 0.0
    %498 = vmatprep.subr.mxu0 0.0
    %499 = vmatpush1.msra.mxu0 0.0
    %500 = vmatprep.subr.mxu0 0.0
    %501 = vmatpush1.msra.mxu0 0.0
    %502 = vmatprep.subr.mxu0 0.0
    %503 = vmatpush1.msra.mxu0 0.0
    %504 = vmatprep.mubr.f32.mxu0 0.0
    %v505 = vand.u32 %v51, 4294901760
    %506 = vmatmul.mubr.f32.gmra.mrb[0].mxu0 %v505
    %v507 = vpop.f32.mrb[0].mxu0
    %v508 = vadd.f32 %v413, %v507
    %v509 = vpop.f32.mrb[0].mxu0
    %510 = vdwg.mxu0
    %511 = vmatprep.subr.mxu0 0.0
    %v512 = vand.u32 %v41, 4294901760
    %513 = vmatpush1.msra.mxu0 %v512
    %514 = vmatprep.subr.mxu0 0.0
    %v515 = vand.u32 %v42, 4294901760
    %516 = vmatpush1.msra.mxu0 %v515
    %517 = vmatprep.subr.mxu0 0.0
    %v518 = vand.u32 %v43, 4294901760
    %519 = vmatpush1.msra.mxu0 %v518
    %520 = vmatprep.subr.mxu0 0.0
    %v521 = vand.u32 %v44, 4294901760
    %522 = vmatpush1.msra.mxu0 %v521
    %523 = vmatprep.subr.mxu0 0.0
    %v524 = vand.u32 %v45, 4294901760
    %525 = vmatpush1.msra.mxu0 %v524
    %526 = vmatprep.subr.mxu0 0.0
    %v527 = vand.u32 %v46, 4294901760
    %528 = vmatpush1.msra.mxu0 %v527
    %529 = vmatprep.subr.mxu0 0.0
    %v530 = vand.u32 %v47, 4294901760
    %531 = vmatpush1.msra.mxu0 %v530
    %532 = vmatprep.subr.mxu0 0.0
    %v533 = vand.u32 %v48, 4294901760
    %534 = vmatpush1.msra.mxu0 %v533
    %535 = vmatprep.subr.mxu0 0.0
    %536 = vmatpush1.msra.mxu0 0.0
    %537 = vmatprep.subr.mxu0 0.0
    %538 = vmatpush1.msra.mxu0 0.0
    %539 = vmatprep.subr.mxu0 0.0
    %540 = vmatpush1.msra.mxu0 0.0
    %541 = vmatprep.subr.mxu0 0.0
    %542 = vmatpush1.msra.mxu0 0.0
    %543 = vmatprep.subr.mxu0 0.0
    %544 = vmatpush1.msra.mxu0 0.0
    %545 = vmatprep.subr.mxu0 0.0
    %546 = vmatpush1.msra.mxu0 0.0
    %547 = vmatprep.subr.mxu0 0.0
    %548 = vmatpush1.msra.mxu0 0.0
    %549 = vmatprep.subr.mxu0 0.0
    %550 = vmatpush1.msra.mxu0 0.0
    %551 = vmatprep.subr.mxu0 0.0
    %552 = vmatpush1.msra.mxu0 0.0
    %553 = vmatprep.subr.mxu0 0.0
    %554 = vmatpush1.msra.mxu0 0.0
    %555 = vmatprep.subr.mxu0 0.0
    %556 = vmatpush1.msra.mxu0 0.0
    %557 = vmatprep.subr.mxu0 0.0
    %558 = vmatpush1.msra.mxu0 0.0
    %559 = vmatprep.subr.mxu0 0.0
    %560 = vmatpush1.msra.mxu0 0.0
    %561 = vmatprep.subr.mxu0 0.0
    %562 = vmatpush1.msra.mxu0 0.0
    %563 = vmatprep.subr.mxu0 0.0
    %564 = vmatpush1.msra.mxu0 0.0
    %565 = vmatprep.subr.mxu0 0.0
    %566 = vmatpush1.msra.mxu0 0.0
    %567 = vmatprep.subr.mxu0 0.0
    %568 = vmatpush1.msra.mxu0 0.0
    %569 = vmatprep.subr.mxu0 0.0
    %570 = vmatpush1.msra.mxu0 0.0
    %571 = vmatprep.subr.mxu0 0.0
    %572 = vmatpush1.msra.mxu0 0.0
    %573 = vmatprep.subr.mxu0 0.0
    %574 = vmatpush1.msra.mxu0 0.0
    %575 = vmatprep.subr.mxu0 0.0
    %576 = vmatpush1.msra.mxu0 0.0
    %577 = vmatprep.subr.mxu0 0.0
    %578 = vmatpush1.msra.mxu0 0.0
    %579 = vmatprep.subr.mxu0 0.0
    %580 = vmatpush1.msra.mxu0 0.0
    %581 = vmatprep.subr.mxu0 0.0
    %582 = vmatpush1.msra.mxu0 0.0
    %583 = vmatprep.mubr.f32.mxu0 0.0
    %v584 = vand.u32 %v51, 4294901760
    %585 = vmatmul.mubr.f32.gmra.mrb[0].mxu0 %v584
    %v586 = vpop.f32.mrb[0].mxu0
    %v587 = vadd.f32 %v508, %v586
    %v588 = vpop.f32.mrb[0].mxu0
    %589 = vdwg.mxu0
    %v590 = vld [vmem:[%s3] sm:$0x1]
    %v591 = vld [vmem:[%s3 + $0x1] sm:$0x1]
    %v592 = vld [vmem:[%s3 + $0x2] sm:$0x1]
    %594 = vrot.lane.b32.xlu0 %v587, 120
    %v595 = vpop.permute.xlu0 %594
    %v597 = vrcp.pop %v595
    %v598 = vmul.f32 %v587, %v597
    %600 = vrot.lane.b32.xlu0 %v592, 16
    %v601 = vpop.permute.xlu0 %600
    %v603 = vrcp.pop %v601
    %v604 = vmul.f32 %v587, %v603
    %v605 = vsub.f32 %v598, %v590
    %v606 = vand.u32 2147483647, %v605
    %vm607 = vcmp.lt.f32.partialorder %v606, 1.0
    %v608 = vmul.f32 %v605, 0.5
    %v609 = vmul.f32 %v608, %v605
    %v610 = vsub.f32 %v606, 0.5
    %v611 = vsel %vm607, %v609, %v610
    %vm612 = vcmask 57344
    %v613 = vsel %vm612, %v611, 0.0
    %614 = vadd.xlane.f32.xlu0 %v613
    %v615 = vpop.xlane.xlu0 %614
    %v616 = vmul.f32 %v615, 0.125
    %v617 = vmul.f32 %v616, 10.0
    %619 = vrot.lane.b32.xlu0 %v591, 16
    %v620 = vpop.permute.xlu0 %619
    %v622 = vsub.f32 %v604, %v620
    %v623 = vand.u32 2147483647, %v622
    %vm624 = vcmp.lt.f32.partialorder %v623, 1.0
    %v625 = vmul.f32 %v622, 0.5
    %v626 = vmul.f32 %v625, %v622
    %v627 = vsub.f32 %v623, 0.5
    %v628 = vsel %vm624, %v626, %v627
    %630 = vrot.lane.b32.xlu0 %v628, 112
    %v631 = vpop.permute.xlu0 %630
    %vm633 = vcmask 8192
    %v634 = vsel %vm633, %v631, 0.0
    %635 = vadd.xlane.f32.xlu0 %v634
    %v636 = vpop.xlane.xlu0 %635
    %v637 = vmul.f32 %v636, 0.5
    %v638 = vadd.f32 %v35, %v617
    %v639 = vadd.f32 %v638, %v637
    %vm640 = vcmp.eq.s32.totalorder %v20, 0
    %v641 = vsel %vm640, %v639, 0.0
    %vm642 = vcmp.eq.s32.totalorder %v20, 1
    %v643 = vsel %vm642, %v35, 0.0
    %v644 = vadd.f32 %v641, %v643
    %vm645 = vcmp.eq.s32.totalorder %v20, 2
    %v646 = vsel %vm645, %v617, 0.0
    %v647 = vadd.f32 %v644, %v646
    %vm648 = vcmp.eq.s32.totalorder %v20, 3
    %v649 = vsel %vm648, %v637, 0.0
    %v650 = vadd.f32 %v647, %v649
    %vm651 = vcmask 24576
    %652 = vst.msk [vmem:[#allocation2] sm:$0x1] %vm651, %v650
    // Predicated region
    $region18: #{tpu_custom_call.1} parent=1 // pred_check
      _
    $region19: #{tpu_custom_call.1} parent=1 // pred_check_branch
      %654 = sbr.rel (0) target = $region21
    $region20: #{tpu_custom_call.1} parent=1 // pred_region
      %s656 = ssub.s32 16, 16
      %657 = vsyncadd [#allocation3], %s656
      %s659 = sshll.u32 [#allocation2], 4
      %s660 = int_to_ptr.vmem [resolvable:$true] %s659
      %662 = dma.vmem_to_hbm [thread:$0]  %s660, 16, %s4, [#allocation3]
    $region21: #{tpu_custom_call.1} parent=1 // pred_fallthru
      _
    // Predicated region
    $region22: #{tpu_custom_call.1} parent=1 // pred_check
      _
    $region23: #{tpu_custom_call.1} parent=1 // pred_check_branch
      %664 = sbr.rel (0) target = $region25
    $region24: #{tpu_custom_call.1} parent=1 // pred_region
      %665 = dma.done [#allocation3], 16
    $region25: #{tpu_custom_call.1} parent=1 // pred_fallthru
      _
    %666 = vsyncpa [#allocation3], 1

</llo_original>
